<compile_context>
chip_gen: v7x
topology: tpu7x:2x2x1
jax: 0.10.0
libtpu: 0.0.40
codegen_flags: <defaults>
</compile_context>

<pallas_src>
import functools

import jax
import jax.numpy as jnp
from jax.experimental import pallas as pl
from jax.experimental.pallas import tpu as pltpu


def _wce_kernel(w_ref, logits_ref, labels_ref, perpix_ref, lpart_ref, wpart_ref):
    """One grid step: logits tile (1, N, TP) — classes on sublanes, pixels on lanes."""
    x = logits_ref[0].astype(jnp.float32)          # (N, TP)
    labels = labels_ref[0]                         # (1, TP) int32
    n = x.shape[0]

    # Numerically stable log-sum-exp over the class (sublane) axis.
    m = jnp.max(x, axis=0, keepdims=True)                                   # (1, TP)
    lse = m + jnp.log(jnp.sum(jnp.exp(x - m), axis=0, keepdims=True))       # (1, TP)

    # Gather target logit / class weight with a short unrolled select loop
    # (avoids building an (N, TP) one-hot). w_ref[c] is a scalar SMEM read.
    picked = jnp.zeros_like(lse)
    w_pix = jnp.zeros_like(lse)
    for c in range(n):                              # static unroll, N is small
        sel = labels == c                           # (1, TP) bool
        picked = jnp.where(sel, x[c:c + 1, :], picked)
        w_pix = jnp.where(sel, w_ref[c], w_pix)

    per = w_pix * (lse - picked)                    # (1, TP) weighted per-pixel NLL

    perpix_ref[0] = per
    # Per-tile partial sums, stored lane-dense (scalar broadcast over 128 lanes).
    # Final reduction is done in the wrapper so the grid can stay fully parallel.
    lpart_ref[...] = jnp.full(lpart_ref.shape, jnp.sum(per), jnp.float32)
    wpart_ref[...] = jnp.full(wpart_ref.shape, jnp.sum(w_pix), jnp.float32)


def _pick_pixel_tile(wh, n):
    """Largest lane-aligned pixel tile: big enough to amortize per-step overhead,
    small enough to keep the double-buffered logits tile a few MiB (v7x VMEM)."""
    target = min(8192, max(128, ((1 << 22) // (4 * max(n, 1))) // 128 * 128))
    if wh <= target:
        return wh                                   # full row: always a legal block
    tp = (min(target, wh) // 128) * 128
    while tp >= 128:
        if wh % tp == 0:
            return tp
        tp -= 128
    return wh                                       # no aligned divisor: full row


@functools.partial(jax.jit, static_argnames=("reduction",))
def weighted_ce_loss(logits, labels, weights, reduction="mean"):
    """logits: (B, N, W, H) float; labels: (B, W, H) int; weights: (N,) float."""
    B, N, W, H = logits.shape
    WH = W * H
    TP = _pick_pixel_tile(WH, N)
    assert WH % TP == 0
    n_tiles = WH // TP

    x = logits.reshape(B, N, WH)                    # metadata-only reshape (NCHW kept)
    y = labels.reshape(B, 1, WH).astype(jnp.int32)
    w = weights.astype(jnp.float32)                 # (N,) -> SMEM via scalar prefetch

    per_pixel, lpart, wpart = pl.pallas_call(
        _wce_kernel,
        out_shape=(
            jax.ShapeDtypeStruct((B, 1, WH), jnp.float32),            # per-pixel w*NLL
            jax.ShapeDtypeStruct((B, n_tiles, 1, 128), jnp.float32),  # sum(w*loss) / tile
            jax.ShapeDtypeStruct((B, n_tiles, 1, 128), jnp.float32),  # sum(w) / tile
        ),
        grid_spec=pltpu.PrefetchScalarGridSpec(
            num_scalar_prefetch=1,
            grid=(B, n_tiles),
            in_specs=[
                pl.BlockSpec((1, N, TP), lambda b, t, ws: (b, 0, t)),   # logits tile
                pl.BlockSpec((1, 1, TP), lambda b, t, ws: (b, 0, t)),   # labels tile
            ],
            out_specs=[
                pl.BlockSpec((1, 1, TP), lambda b, t, ws: (b, 0, t)),
                pl.BlockSpec((1, 1, 1, 128), lambda b, t, ws: (b, t, 0, 0)),
                pl.BlockSpec((1, 1, 1, 128), lambda b, t, ws: (b, t, 0, 0)),
            ],
        ),
        compiler_params=pltpu.CompilerParams(
            dimension_semantics=("parallel", "parallel")),
    )(w, x, y)

    if reduction == "none":
        return per_pixel.reshape(B, W, H)
    loss_sum = jnp.sum(lpart[..., 0])
    if reduction == "sum":
        return loss_sum
    # 'mean': PyTorch weighted mean divides by the sum of per-pixel weights.
    return loss_sum / jnp.sum(wpart[..., 0])


def _reference(logits, labels, weights, reduction="mean"):
    # pure-JAX reference of F.cross_entropy(..., weight=weights, reduction=...)
    logp = jax.nn.log_softmax(logits, axis=1)                          # (B, N, W, H)
    picked = jnp.take_along_axis(logp, labels[:, None], axis=1)[:, 0]  # (B, W, H)
    w_pix = weights[labels]                                            # (B, W, H)
    per = -w_pix * picked
    if reduction == "none":
        return per
    if reduction == "sum":
        return per.sum()
    return per.sum() / w_pix.sum()


if __name__ == "__main__":
    key = jax.random.PRNGKey(0)
    B, N, W, H = 2, 4, 16, 16
    k1, k2 = jax.random.split(key)

    logits = jax.random.normal(k1, (B, N, W, H), dtype=jnp.float32)
    labels = jax.random.randint(k2, (B, W, H), 0, N, dtype=jnp.int32)
    weights = jnp.array([1.0, 2.0, 0.5, 1.5], dtype=jnp.float32)

    loss = weighted_ce_loss(logits, labels, weights, reduction="mean")
    jax.block_until_ready(loss)
    ref = _reference(logits, labels, weights, reduction="mean")
    assert jnp.allclose(loss, ref, rtol=1e-5, atol=1e-5), (loss, ref)

    per = weighted_ce_loss(logits, labels, weights, reduction="none")
    jax.block_until_ready(per)
    assert jnp.allclose(per, _reference(logits, labels, weights, "none"),
                        rtol=1e-5, atol=1e-5)

    s = weighted_ce_loss(logits, labels, weights, reduction="sum")
    jax.block_until_ready(s)
    assert jnp.allclose(s, _reference(logits, labels, weights, "sum"),
                        rtol=1e-5, atol=1e-5), (s,)

    print("KERNEL_OK")
</pallas_src>

<mosaic_0001>
module attributes {stable_mosaic.version = 11 : i64} {
  func.func @_wce_kernel(%arg0: i32, %arg1: i32, %arg2: memref<4xf32, #tpu.memory_space<smem>>, %arg3: memref<1x4x256xf32, #tpu.memory_space<vmem>>, %arg4: memref<1x1x256xi32, #tpu.memory_space<vmem>>, %arg5: memref<1x1x256xf32, #tpu.memory_space<vmem>>, %arg6: memref<1x1x1x128xf32, #tpu.memory_space<vmem>>, %arg7: memref<1x1x1x128xf32, #tpu.memory_space<vmem>>) attributes {dimension_semantics = [#tpu.dimension_semantics<parallel>, #tpu.dimension_semantics<parallel>], iteration_bounds = array<i64: 2, 1>, scalar_prefetch = 1 : i64, scratch_operands = 0 : i64, tpu.core_type = #tpu.core_type<tc>, window_params = [{transform_indices = @transform_0, window_bounds = array<i64: 1, 4, 256>}, {transform_indices = @transform_1, window_bounds = array<i64: 1, 1, 256>}, {transform_indices = @transform_2, window_bounds = array<i64: 1, 1, 256>}, {transform_indices = @transform_3, window_bounds = array<i64: 1, 1, 1, 128>}, {transform_indices = @transform_4, window_bounds = array<i64: 1, 1, 1, 128>}]} {
    %c0 = arith.constant 0 : index
    %c0_0 = arith.constant 0 : index
    %c0_1 = arith.constant 0 : index
    %0 = vector.load %arg3[%c0, %c0_0, %c0_1] : memref<1x4x256xf32, #tpu.memory_space<vmem>>, vector<1x4x256xf32>
    %1 = vector.shape_cast %0 : vector<1x4x256xf32> to vector<4x256xf32>
    %c0_2 = arith.constant 0 : index
    %c0_3 = arith.constant 0 : index
    %c0_4 = arith.constant 0 : index
    %2 = vector.load %arg4[%c0_2, %c0_3, %c0_4] : memref<1x1x256xi32, #tpu.memory_space<vmem>>, vector<1x1x256xi32>
    %3 = vector.shape_cast %2 : vector<1x1x256xi32> to vector<1x256xi32>
    %cst = arith.constant dense<0xFF800000> : vector<256xf32>
    %4 = vector.multi_reduction <maximumf>, %1, %cst [0] : vector<4x256xf32> to vector<256xf32>
    %5 = vector.shape_cast %4 : vector<256xf32> to vector<1x256xf32>
    %6 = vector.broadcast %5 : vector<1x256xf32> to vector<4x256xf32>
    %7 = arith.subf %1, %6 : vector<4x256xf32>
    %8 = math.exp %7 : vector<4x256xf32>
    %cst_5 = arith.constant dense<0.000000e+00> : vector<256xf32>
    %9 = vector.multi_reduction <add>, %8, %cst_5 [0] : vector<4x256xf32> to vector<256xf32>
    %10 = vector.shape_cast %9 : vector<256xf32> to vector<1x256xf32>
    %11 = math.log %10 : vector<1x256xf32>
    %12 = arith.addf %5, %11 : vector<1x256xf32>
    %cst_6 = arith.constant 0.000000e+00 : f32
    %13 = vector.broadcast %cst_6 : f32 to vector<1x256xf32>
    %cst_7 = arith.constant 0.000000e+00 : f32
    %14 = vector.broadcast %cst_7 : f32 to vector<1x256xf32>
    %c0_i32 = arith.constant 0 : i32
    %15 = vector.broadcast %c0_i32 : i32 to vector<1x256xi32>
    %16 = arith.cmpi eq, %3, %15 : vector<1x256xi32>
    %17 = vector.extract_strided_slice %1 {offsets = [0, 0], sizes = [1, 256], strides = [1, 1]} : vector<4x256xf32> to vector<1x256xf32>
    %18 = arith.select %16, %17, %13 : vector<1x256xi1>, vector<1x256xf32>
    %c0_8 = arith.constant 0 : index
    %19 = memref.load %arg2[%c0_8] : memref<4xf32, #tpu.memory_space<smem>>
    %20 = vector.broadcast %19 : f32 to vector<1x256xf32>
    %21 = arith.select %16, %20, %14 : vector<1x256xi1>, vector<1x256xf32>
    %c1_i32 = arith.constant 1 : i32
    %22 = vector.broadcast %c1_i32 : i32 to vector<1x256xi32>
    %23 = arith.cmpi eq, %3, %22 : vector<1x256xi32>
    %24 = vector.extract_strided_slice %1 {offsets = [1, 0], sizes = [1, 256], strides = [1, 1]} : vector<4x256xf32> to vector<1x256xf32>
    %25 = arith.select %23, %24, %18 : vector<1x256xi1>, vector<1x256xf32>
    %c1 = arith.constant 1 : index
    %26 = memref.load %arg2[%c1] : memref<4xf32, #tpu.memory_space<smem>>
    %27 = vector.broadcast %26 : f32 to vector<1x256xf32>
    %28 = arith.select %23, %27, %21 : vector<1x256xi1>, vector<1x256xf32>
    %c2_i32 = arith.constant 2 : i32
    %29 = vector.broadcast %c2_i32 : i32 to vector<1x256xi32>
    %30 = arith.cmpi eq, %3, %29 : vector<1x256xi32>
    %31 = vector.extract_strided_slice %1 {offsets = [2, 0], sizes = [1, 256], strides = [1, 1]} : vector<4x256xf32> to vector<1x256xf32>
    %32 = arith.select %30, %31, %25 : vector<1x256xi1>, vector<1x256xf32>
    %c2 = arith.constant 2 : index
    %33 = memref.load %arg2[%c2] : memref<4xf32, #tpu.memory_space<smem>>
    %34 = vector.broadcast %33 : f32 to vector<1x256xf32>
    %35 = arith.select %30, %34, %28 : vector<1x256xi1>, vector<1x256xf32>
    %c3_i32 = arith.constant 3 : i32
    %36 = vector.broadcast %c3_i32 : i32 to vector<1x256xi32>
    %37 = arith.cmpi eq, %3, %36 : vector<1x256xi32>
    %38 = vector.extract_strided_slice %1 {offsets = [3, 0], sizes = [1, 256], strides = [1, 1]} : vector<4x256xf32> to vector<1x256xf32>
    %39 = arith.select %37, %38, %32 : vector<1x256xi1>, vector<1x256xf32>
    %c3 = arith.constant 3 : index
    %40 = memref.load %arg2[%c3] : memref<4xf32, #tpu.memory_space<smem>>
    %41 = vector.broadcast %40 : f32 to vector<1x256xf32>
    %42 = arith.select %37, %41, %35 : vector<1x256xi1>, vector<1x256xf32>
    %43 = arith.subf %12, %39 : vector<1x256xf32>
    %44 = arith.mulf %42, %43 : vector<1x256xf32>
    %c0_9 = arith.constant 0 : index
    %c0_10 = arith.constant 0 : index
    %c0_11 = arith.constant 0 : index
    %45 = vector.load %arg5[%c0_9, %c0_10, %c0_11] : memref<1x1x256xf32, #tpu.memory_space<vmem>>, vector<1x1x256xf32>
    %46 = vector.shape_cast %45 : vector<1x1x256xf32> to vector<1x256xf32>
    %47 = vector.shape_cast %44 : vector<1x256xf32> to vector<1x1x256xf32>
    tpu.vector_store %arg5[%c0_9, %c0_10, %c0_11], %47 {strides = array<i32>} : memref<1x1x256xf32, #tpu.memory_space<vmem>>, vector<1x1x256xf32>,
    %48 = vector.shape_cast %44 : vector<1x256xf32> to vector<1x1x256xf32>
    %cst_12 = arith.constant dense<0.000000e+00> : vector<1xf32>
    %49 = vector.multi_reduction <add>, %48, %cst_12 [1, 2] : vector<1x1x256xf32> to vector<1xf32>
    %50 = vector.shape_cast %49 : vector<1xf32> to vector<1x1x1xf32>
    %51 = vector.extract %50[0, 0, 0] : f32 from vector<1x1x1xf32>
    %52 = vector.broadcast %51 : f32 to vector<1x1x1x128xf32>
    %c0_13 = arith.constant 0 : index
    %c0_14 = arith.constant 0 : index
    %c0_15 = arith.constant 0 : index
    %c0_16 = arith.constant 0 : index
    %53 = vector.load %arg6[%c0_13, %c0_14, %c0_15, %c0_16] : memref<1x1x1x128xf32, #tpu.memory_space<vmem>>, vector<1x1x1x128xf32>
    tpu.vector_store %arg6[%c0_13, %c0_14, %c0_15, %c0_16], %52 {strides = array<i32>} : memref<1x1x1x128xf32, #tpu.memory_space<vmem>>, vector<1x1x1x128xf32>,
    %54 = vector.shape_cast %42 : vector<1x256xf32> to vector<1x1x256xf32>
    %cst_17 = arith.constant dense<0.000000e+00> : vector<1xf32>
    %55 = vector.multi_reduction <add>, %54, %cst_17 [1, 2] : vector<1x1x256xf32> to vector<1xf32>
    %56 = vector.shape_cast %55 : vector<1xf32> to vector<1x1x1xf32>
    %57 = vector.extract %56[0, 0, 0] : f32 from vector<1x1x1xf32>
    %58 = vector.broadcast %57 : f32 to vector<1x1x1x128xf32>
    %c0_18 = arith.constant 0 : index
    %c0_19 = arith.constant 0 : index
    %c0_20 = arith.constant 0 : index
    %c0_21 = arith.constant 0 : index
    %59 = vector.load %arg7[%c0_18, %c0_19, %c0_20, %c0_21] : memref<1x1x1x128xf32, #tpu.memory_space<vmem>>, vector<1x1x1x128xf32>
    tpu.vector_store %arg7[%c0_18, %c0_19, %c0_20, %c0_21], %58 {strides = array<i32>} : memref<1x1x1x128xf32, #tpu.memory_space<vmem>>, vector<1x1x1x128xf32>,
    return
  }
  func.func @transform_0(%arg0: i32, %arg1: i32, %arg2: memref<4xf32, #tpu.memory_space<smem>>) -> (i32, i32, i32) {
    %c0_i32 = arith.constant 0 : i32
    %c0_i32_0 = arith.constant 0 : i32
    return %arg0, %c0_i32, %arg1 : i32, i32, i32
  }
  func.func @transform_1(%arg0: i32, %arg1: i32, %arg2: memref<4xf32, #tpu.memory_space<smem>>) -> (i32, i32, i32) {
    %c0_i32 = arith.constant 0 : i32
    %c0_i32_0 = arith.constant 0 : i32
    return %arg0, %c0_i32, %arg1 : i32, i32, i32
  }
  func.func @transform_2(%arg0: i32, %arg1: i32, %arg2: memref<4xf32, #tpu.memory_space<smem>>) -> (i32, i32, i32) {
    %c0_i32 = arith.constant 0 : i32
    %c0_i32_0 = arith.constant 0 : i32
    return %arg0, %c0_i32, %arg1 : i32, i32, i32
  }
  func.func @transform_3(%arg0: i32, %arg1: i32, %arg2: memref<4xf32, #tpu.memory_space<smem>>) -> (i32, i32, i32, i32) {
    %c0_i32 = arith.constant 0 : i32
    %c0_i32_0 = arith.constant 0 : i32
    %c0_i32_1 = arith.constant 0 : i32
    return %arg0, %arg1, %c0_i32, %c0_i32_0 : i32, i32, i32, i32
  }
  func.func @transform_4(%arg0: i32, %arg1: i32, %arg2: memref<4xf32, #tpu.memory_space<smem>>) -> (i32, i32, i32, i32) {
    %c0_i32 = arith.constant 0 : i32
    %c0_i32_0 = arith.constant 0 : i32
    %c0_i32_1 = arith.constant 0 : i32
    return %arg0, %arg1, %c0_i32, %c0_i32_0 : i32, i32, i32, i32
  }
}

</mosaic_0001>

<llo_original>
// kernel: weighted_ce_loss.1
$region0: #{weighted_ce_loss.1}
  #allocation0 [shape = 'u32[]', space=smem, size = 0x4, offset = 0x4, fixed_abs, tag = 'smem constant byte address 0x4 - core index']
  #allocation1 [shape = 'u32[144,128]{1,0:T(1,128)}', space=vmem, size = 0x12000, scoped, tag = 'internal scratch']
  #allocation2 [shape = 's32[1]{0}', space=sflag, size = 0x4, scoped, tag = 'scoped memory for weighted_ce_loss.1']
  #allocation3 [shape = 'u8[512]{0}', space=smem, size = 0x200, scoped, tag = 'prefetched SMEM operand 0']
  %s0 = inlined_call_operand.vmem [shape: f32[4], index: 0, kind: input, shape index: {}]
  %s1 = inlined_call_operand.vmem [shape: f32[2,4,256], index: 1, kind: input, shape index: {}]
  %s2 = inlined_call_operand.vmem [shape: s32[2,1,256], index: 2, kind: input, shape index: {}]
  %s3 = inlined_call_operand.hbm [shape: f32[2,1,256], index: 3, kind: output, shape index: {0}]
  %s4 = inlined_call_operand.vmem [shape: f32[2,1,1,128], index: 4, kind: output, shape index: {1}]
  %s5 = inlined_call_operand.vmem [shape: f32[2,1,1,128], index: 5, kind: output, shape index: {2}]
  %6 = xla_tuple %s3, %s4, %s5
  %s7 = sld [smem:[#allocation0]]
  $region57: #{weighted_ce_loss.1} parent=0
    _
  %s9 = ssub.s32 1, %s7
  %s10 = scalar_select 0, %s9, %s7
  %s11 = sshll.u32 %s0, 4
  %s12 = int_to_ptr.vmem [resolvable:$true] %s11
  %14 = dma.vmem_to_smem %s12, 16, [#allocation3], [#allocation2]
  %15 = dma.done [#allocation2], 16
  %16 = sfence
  $region1: #{weighted_ce_loss.1} parent=0
    #allocation4 [shape = 'u8[2048]{0}', space=vmem, size = 0x800, scoped, tag = 'output window, operand 0']
    #allocation5 [shape = 's32[2]{0}', space=sflag, size = 0x8, scoped, tag = 'scoped memory for weighted_ce_loss.1']
    %17 = vsyncpa [#allocation5], 0
    %s18 = scalar_lea.sflag [#allocation5], 1
    %19 = vsyncpa %s18, 0
    loop: start=0, step=1, limit=4
    $region2: #{weighted_ce_loss.1} parent=1 // loop_pre_header
      _
    $region3: #{weighted_ce_loss.1} parent=1 // loop_header
      %s21 = sphi 0, %s25
      %p22 = scmp.ge.s32.totalorder %s21, 4
      %s28 = sphi 0, %s40
      %s29 = sphi 0, %s36
      %s30 = sphi 0, %s28
      %s31 = sphi 0, %s29
      %s32 = sphi 0, %s30
      %s33 = sphi 0, %s31
      %s45 = sphi 0, %s47
      %s48 = sphi 0, %s45
      %s49 = sphi 0, %s48
      %s65 = sphi 0, %s49
      %s73 = sphi 0, %s75
      %s76 = sphi 0, %s73
      %s77 = sphi 0, %s76
      %s93 = sphi 0, %s77
      %s101 = sphi 0, %s103
      %s104 = sphi 0, %s101
      %s105 = sphi 0, %s104
      %s121 = sphi 0, %s105
      %s129 = sphi 0, %s131
      %s132 = sphi 0, %s129
      %s133 = sphi 0, %s132
      %s149 = sphi 0, %s133
      %s157 = sphi 0, %s159
      %s160 = sphi 0, %s157
      %s161 = sphi 0, %s160
      %s177 = sphi 0, %s161
    $region4: #{weighted_ce_loss.1} parent=1 // loop_header_branch
      %24 = sbr.rel (%p22) target = $region8
    $region5: #{weighted_ce_loss.1} parent=1 // loop_body
      %s26 = ssub.s32 %s21, 1
      %s27 = ssub.s32 %s21, 2
      %s34 = sadd.s32 1, %s29
      %p35 = scmp.ge.s32.totalorder %s34, 1
      %s36 = scalar_select %p35, 0, %s34
      %s37 = sadd.s32 1, %s28
      %s38 = scalar_select %p35, %s37, %s28
      %p39 = scmp.ge.s32.totalorder %s38, 2
      %s40 = scalar_select %p39, 0, %s38
      %s41 = ssub.s32 %s28, %s40
      %s42 = ssub.s32 %s29, %s36
      %s43 = sor.u32 %s41, %s42
      %p44 = scmp.eq.s32.totalorder %s43, 0
      %s46 = sadd.s32 %s45, 1
      %s47 = scalar_select %p44, %s45, %s46
      %p50 = pneg %p44
      %p51 = scmp.eq.s32.totalorder %s21, 1
      %p52 = por %p50, %p51
      %p53 = scmp.ne.s32.totalorder %s45, %s48
      %p54 = scmp.eq.s32.totalorder %s21, 0
      %p55 = por %p53, %p54
      %p56 = scmp.ne.s32.totalorder %s45, %s48
      %p57 = scmp.eq.s32.totalorder %s26, 1
      %p58 = por %p56, %p57
      %p59 = scmp.ne.s32.totalorder %s48, %s49
      %p60 = scmp.eq.s32.totalorder %s26, 0
      %p61 = por %p59, %p60
      %p62 = scmp.ne.s32.totalorder %s48, %s49
      %p63 = scmp.eq.s32.totalorder %s27, 1
      %p64 = por %p62, %p63
      %p66 = scmp.ne.s32.totalorder %s49, %s65
      %p67 = scmp.eq.s32.totalorder %s27, 0
      %p68 = por %p66, %p67
      %s69 = ssub.s32 %s28, %s40
      %s70 = ssub.s32 %s29, %s36
      %s71 = sor.u32 %s69, %s70
      %p72 = scmp.eq.s32.totalorder %s71, 0
      %s74 = sadd.s32 %s73, 1
      %s75 = scalar_select %p72, %s73, %s74
      %p78 = pneg %p72
      %p79 = scmp.eq.s32.totalorder %s21, 1
      %p80 = por %p78, %p79
      %p81 = scmp.ne.s32.totalorder %s73, %s76
      %p82 = scmp.eq.s32.totalorder %s21, 0
      %p83 = por %p81, %p82
      %p84 = scmp.ne.s32.totalorder %s73, %s76
      %p85 = scmp.eq.s32.totalorder %s26, 1
      %p86 = por %p84, %p85
      %p87 = scmp.ne.s32.totalorder %s76, %s77
      %p88 = scmp.eq.s32.totalorder %s26, 0
      %p89 = por %p87, %p88
      %p90 = scmp.ne.s32.totalorder %s76, %s77
      %p91 = scmp.eq.s32.totalorder %s27, 1
      %p92 = por %p90, %p91
      %p94 = scmp.ne.s32.totalorder %s77, %s93
      %p95 = scmp.eq.s32.totalorder %s27, 0
      %p96 = por %p94, %p95
      %s97 = ssub.s32 %s28, %s40
      %s98 = ssub.s32 %s29, %s36
      %s99 = sor.u32 %s97, %s98
      %p100 = scmp.eq.s32.totalorder %s99, 0
      %s102 = sadd.s32 %s101, 1
      %s103 = scalar_select %p100, %s101, %s102
      %p106 = pneg %p100
      %p107 = scmp.eq.s32.totalorder %s21, 1
      %p108 = por %p106, %p107
      %p109 = scmp.ne.s32.totalorder %s101, %s104
      %p110 = scmp.eq.s32.totalorder %s21, 0
      %p111 = por %p109, %p110
      %p112 = scmp.ne.s32.totalorder %s101, %s104
      %p113 = scmp.eq.s32.totalorder %s26, 1
      %p114 = por %p112, %p113
      %p115 = scmp.ne.s32.totalorder %s104, %s105
      %p116 = scmp.eq.s32.totalorder %s26, 0
      %p117 = por %p115, %p116
      %p118 = scmp.ne.s32.totalorder %s104, %s105
      %p119 = scmp.eq.s32.totalorder %s27, 1
      %p120 = por %p118, %p119
      %p122 = scmp.ne.s32.totalorder %s105, %s121
      %p123 = scmp.eq.s32.totalorder %s27, 0
      %p124 = por %p122, %p123
      %s125 = ssub.s32 %s28, %s40
      %s126 = ssub.s32 %s29, %s36
      %s127 = sor.u32 %s125, %s126
      %p128 = scmp.eq.s32.totalorder %s127, 0
      %s130 = sadd.s32 %s129, 1
      %s131 = scalar_select %p128, %s129, %s130
      %p134 = pneg %p128
      %p135 = scmp.eq.s32.totalorder %s21, 1
      %p136 = por %p134, %p135
      %p137 = scmp.ne.s32.totalorder %s129, %s132
      %p138 = scmp.eq.s32.totalorder %s21, 0
      %p139 = por %p137, %p138
      %p140 = scmp.ne.s32.totalorder %s129, %s132
      %p141 = scmp.eq.s32.totalorder %s26, 1
      %p142 = por %p140, %p141
      %p143 = scmp.ne.s32.totalorder %s132, %s133
      %p144 = scmp.eq.s32.totalorder %s26, 0
      %p145 = por %p143, %p144
      %p146 = scmp.ne.s32.totalorder %s132, %s133
      %p147 = scmp.eq.s32.totalorder %s27, 1
      %p148 = por %p146, %p147
      %p150 = scmp.ne.s32.totalorder %s133, %s149
      %p151 = scmp.eq.s32.totalorder %s27, 0
      %p152 = por %p150, %p151
      %s153 = ssub.s32 %s28, %s40
      %s154 = ssub.s32 %s29, %s36
      %s155 = sor.u32 %s153, %s154
      %p156 = scmp.eq.s32.totalorder %s155, 0
      %s158 = sadd.s32 %s157, 1
      %s159 = scalar_select %p156, %s157, %s158
      %p162 = pneg %p156
      %p163 = scmp.eq.s32.totalorder %s21, 1
      %p164 = por %p162, %p163
      %p165 = scmp.ne.s32.totalorder %s157, %s160
      %p166 = scmp.eq.s32.totalorder %s21, 0
      %p167 = por %p165, %p166
      %p168 = scmp.ne.s32.totalorder %s157, %s160
      %p169 = scmp.eq.s32.totalorder %s26, 1
      %p170 = por %p168, %p169
      %p171 = scmp.ne.s32.totalorder %s160, %s161
      %p172 = scmp.eq.s32.totalorder %s26, 0
      %p173 = por %p171, %p172
      %p174 = scmp.ne.s32.totalorder %s160, %s161
      %p175 = scmp.eq.s32.totalorder %s27, 1
      %p176 = por %p174, %p175
      %p178 = scmp.ne.s32.totalorder %s161, %s177
      %p179 = scmp.eq.s32.totalorder %s27, 0
      %p180 = por %p178, %p179
      %p181 = scmp.le.s32.totalorder 1, %s21
      %p182 = scmp.lt.s32.totalorder %s21, 3
      %p183 = pnand %p181, %p182
      %p184 = pneg %p183
      // Predicated region
      $region9: #{weighted_ce_loss.1} parent=5 // pred_check
        _
      $region10: #{weighted_ce_loss.1} parent=5 // pred_check_branch
        %186 = sbr.rel (%p183) target = $region12
      $region11: #{weighted_ce_loss.1} parent=5 // pred_region
        %s187 = ssub.s32 %s21, 1
      $region12: #{weighted_ce_loss.1} parent=5 // pred_fallthru
        _
      %p188 = scmp.lt.s32.totalorder %s21, 2
      // Predicated region
      $region13: #{weighted_ce_loss.1} parent=5 // pred_check
        %p189 = pneg %p188
      $region14: #{weighted_ce_loss.1} parent=5 // pred_check_branch
        %191 = sbr.rel (%p189) target = $region16
      $region15: #{weighted_ce_loss.1} parent=5 // pred_region
        // Predicated region
        $region17: #{weighted_ce_loss.1} parent=15 // pred_check
          %p192 = pneg %p55
        $region18: #{weighted_ce_loss.1} parent=15 // pred_check_branch
          %194 = sbr.rel (%p192) target = $region20
        $region19: #{weighted_ce_loss.1} parent=15 // pred_region
          %s195 = smul.u32 2, %s29
          %p196 = scmp.lt.s32.totalorder %s28, 1
          %s197 = scalar_select %p196, %s28, 1
          %p198 = scmp.lt.s32.totalorder %s195, 1
          %s199 = scalar_select %p198, %s195, 1
          %s200 = smul.addr %s197, 2
          %s201 = sadd.s32 %s199, %s200
          %s202 = smul.addr %s201, 4
          %s203 = scalar_lea.vmem %s1, %s202
          %s204 = smul.u32 2, %s29
        $region20: #{weighted_ce_loss.1} parent=15 // pred_fallthru
          _
        // Predicated region
        $region21: #{weighted_ce_loss.1} parent=15 // pred_check
          %p205 = pneg %p83
        $region22: #{weighted_ce_loss.1} parent=15 // pred_check_branch
          %207 = sbr.rel (%p205) target = $region24
        $region23: #{weighted_ce_loss.1} parent=15 // pred_region
          %s208 = smul.u32 2, %s29
          %p209 = scmp.lt.s32.totalorder %s28, 1
          %s210 = scalar_select %p209, %s28, 1
          %p211 = scmp.lt.s32.totalorder %s208, 1
          %s212 = scalar_select %p211, %s208, 1
          %s213 = smul.addr %s210, 2
          %s214 = sadd.s32 %s212, %s213
          %s215 = scalar_lea.vmem %s2, %s214
          %s216 = smul.u32 2, %s29
        $region24: #{weighted_ce_loss.1} parent=15 // pred_fallthru
          _
      $region16: #{weighted_ce_loss.1} parent=5 // pred_fallthru
        _
      %p217 = scmp.le.s32.totalorder 1, %s21
      %p218 = scmp.lt.s32.totalorder %s21, 3
      %p219 = pnand %p217, %p218
      %p220 = pneg %p219
      // Predicated region
      $region25: #{weighted_ce_loss.1} parent=5 // pred_check
        _
      $region26: #{weighted_ce_loss.1} parent=5 // pred_check_branch
        %222 = sbr.rel (%p219) target = $region28
      $region27: #{weighted_ce_loss.1} parent=5 // pred_region
        %s223 = ssub.s32 %s21, 1
        %s224 = smul.u32 2, %s31
        %p225 = scmp.lt.s32.totalorder %s30, 1
        %s226 = scalar_select %p225, %s30, 1
        %p227 = scmp.lt.s32.totalorder %s224, 1
        %s228 = scalar_select %p227, %s224, 1
        %s229 = smul.addr %s226, 2
        %s230 = sadd.s32 %s228, %s229
        %s231 = smul.addr %s230, 4
        %s232 = scalar_lea.vmem %s1, %s231
        %p233 = pneg %p61
        %p234 = pneg %p58
        %s235 = smul.u32 2, %s31
        %p236 = scmp.lt.s32.totalorder %s30, 1
        %s237 = scalar_select %p236, %s30, 1
        %p238 = scmp.lt.s32.totalorder %s235, 1
        %s239 = scalar_select %p238, %s235, 1
        %s240 = smul.addr %s237, 2
        %s241 = sadd.s32 %s239, %s240
        %s242 = scalar_lea.vmem %s2, %s241
        %p243 = pneg %p89
        %p244 = pneg %p86
        %p245 = pneg %p117
        %p246 = pneg %p114
        %s247 = sand.u32 %s104, 1
        %s248 = scalar_lea.sflag [#allocation5], %s247
        %s249 = sand.u32 %s104, 1
        %s250 = smul.addr %s249, 2
        %s251 = scalar_lea.vmem [#allocation4], %s250
        %p252 = pneg %p145
        %p253 = pneg %p142
        %p254 = scmp.lt.s32.totalorder %s30, 1
        %s255 = scalar_select %p254, %s30, 1
        %p256 = scmp.lt.s32.totalorder %s31, 0
        %s257 = scalar_select %p256, %s31, 0
        %s258 = sadd.s32 %s257, %s255
        %s259 = scalar_lea.vmem %s4, %s258
        %p260 = pneg %p173
        %p261 = pneg %p170
        %p262 = scmp.lt.s32.totalorder %s30, 1
        %s263 = scalar_select %p262, %s30, 1
        %p264 = scmp.lt.s32.totalorder %s31, 0
        %s265 = scalar_select %p264, %s31, 0
        %s266 = sadd.s32 %s265, %s263
        %s267 = scalar_lea.vmem %s5, %s266
        %s268 = smul.u32 2, %s31
        %p269 = scmp.lt.s32.totalorder %s30, 1
        %s270 = scalar_select %p269, %s30, 1
        %p271 = scmp.lt.s32.totalorder %s268, 1
        %s272 = scalar_select %p271, %s268, 1
        %s273 = smul.addr %s270, 2
        %s274 = sadd.s32 %s272, %s273
        %s275 = smul.addr %s274, 4
        %s276 = scalar_lea.vmem %s1, %s275
        %s277 = smul.u32 2, %s31
        %s278 = smul.u32 2, %s31
        %p279 = scmp.lt.s32.totalorder %s30, 1
        %s280 = scalar_select %p279, %s30, 1
        %p281 = scmp.lt.s32.totalorder %s278, 1
        %s282 = scalar_select %p281, %s278, 1
        %s283 = smul.addr %s280, 2
        %s284 = sadd.s32 %s282, %s283
        %s285 = scalar_lea.vmem %s2, %s284
        %s286 = smul.u32 2, %s31
        %s287 = smul.u32 2, %s31
        %p288 = scmp.lt.s32.totalorder %s30, 1
        %s289 = scalar_select %p288, %s30, 1
        %p290 = scmp.lt.s32.totalorder %s31, 0
        %s291 = scalar_select %p290, %s31, 0
        %s292 = sadd.s32 %s291, %s289
        %s293 = scalar_lea.vmem %s4, %s292
        %p294 = scmp.lt.s32.totalorder %s30, 1
        %s295 = scalar_select %p294, %s30, 1
        %p296 = scmp.lt.s32.totalorder %s31, 0
        %s297 = scalar_select %p296, %s31, 0
        %s298 = sadd.s32 %s297, %s295
        %s299 = scalar_lea.vmem %s5, %s298
        %v300 = vld [vmem:[%s276] sm:$0xff]
        %v301 = vld [vmem:[%s285] sm:$0x3]
        %v303 = vcombine.high %v300, %v300
        %vm305 = vcmask 1043456
        %v306 = vsel %vm305, %v300, -inf
        %v307 = vrot.slane %v306, 4
        %v308 = vmax.f32 %v306, %v307
        %v309 = vrot.slane %v308, 2
        %v310 = vmax.f32 %v308, %v309
        %v311 = vrot.slane %v310, 1
        %v312 = vmax.f32 %v310, %v311
        %v313 = vsel %vm305, %v303, -inf
        %v314 = vrot.slane %v313, 4
        %v315 = vmax.f32 %v313, %v314
        %v316 = vrot.slane %v315, 2
        %v317 = vmax.f32 %v315, %v316
        %v318 = vrot.slane %v317, 1
        %v319 = vmax.f32 %v317, %v318
        %v322 = vcombine.low %v312, %v319
        %v324 = vsub.f32 %v300, %v322
        %v325 = vmul.f32 %v324, 1.442695
        %v326 = vpow.pop %v325
        %v328 = vcombine.high %v326, %v326
        %v330 = vsel %vm305, %v326, 0.0
        %v331 = vrot.slane %v330, 4
        %v332 = vadd.f32 %v330, %v331
        %v333 = vrot.slane %v332, 2
        %v334 = vadd.f32 %v332, %v333
        %v335 = vrot.slane %v334, 1
        %v336 = vadd.f32 %v334, %v335
        %v337 = vsel %vm305, %v328, 0.0
        %v338 = vrot.slane %v337, 4
        %v339 = vadd.f32 %v337, %v338
        %v340 = vrot.slane %v339, 2
        %v341 = vadd.f32 %v339, %v340
        %v342 = vrot.slane %v341, 1
        %v343 = vadd.f32 %v341, %v342
        %v344 = vlog2.pop %v336
        %v345 = vmul.f32 %v344, 0.6931472
        %v346 = vlog2.pop %v343
        %v347 = vmul.f32 %v346, 0.6931472
        %v348 = vadd.f32 %v312, %v345
        %v349 = vadd.f32 %v319, %v347
        %vm350 = vcmp.eq.s32.totalorder %v301, 0
        %v352 = vunpack.c.l.s4 1966171168
        %v353 = vunpack.c.0.s8 %v352
        %v354 = vlaneseq
        %v355 = vshrl.u32 %v354, 7
        %v356 = vsub.s32 %v353, %v355
        %v357 = vrot.slane %v300, %v356
        %v359 = vunpack.c.l.s4 1966171168
        %v360 = vunpack.c.0.s8 %v359
        %v361 = vlaneseq
        %v362 = vshrl.u32 %v361, 7
        %v363 = vsub.s32 %v360, %v362
        %v364 = vrot.slane %v357, %v363
        %v366 = vsel %vm350, %v364, 0.0
        %s367 = sld [smem:[#allocation3]]
        %v368 = vstv %s367
        %v369 = vsel %vm350, %v368, 0.0
        %vm370 = vcmp.eq.s32.totalorder %v301, 1
        %v371 = vcombine.high %v357, %v357
        %v373 = vunpack.c.l.s4 1966171168
        %v374 = vunpack.c.0.s8 %v373
        %v375 = vlaneseq
        %v376 = vshrl.u32 %v375, 7
        %v377 = vsub.s32 %v374, %v376
        %v378 = vrot.slane %v371, %v377
        %v380 = vsel %vm370, %v378, %v366
        %s381 = sld [smem:[#allocation3 + $0x1]]
        %v382 = vstv %s381
        %v383 = vsel %vm370, %v382, %v369
        %vm384 = vcmp.eq.s32.totalorder %v301, 2
        %v385 = vcombine.high %v364, %v364
        %v387 = vsel %vm384, %v385, %v380
        %s388 = sld [smem:[#allocation3 + $0x2]]
        %v389 = vstv %s388
        %v390 = vsel %vm384, %v389, %v383
        %vm391 = vcmp.eq.s32.totalorder %v301, 3
        %v392 = vcombine.high %v378, %v378
        %v394 = vsel %vm391, %v392, %v387
        %s395 = sld [smem:[#allocation3 + $0x3]]
        %v396 = vstv %s395
        %v397 = vsel %vm391, %v396, %v390
        %v399 = vlaneseq
        %v400 = vshrl.u32 %v399, 7
        %v401 = vsub.s32 0, %v400
        %v402 = vrot.slane %v394, %v401
        %v403 = vlaneseq
        %v404 = vshrl.u32 %v403, 7
        %v405 = vsub.s32 1, %v404
        %v406 = vrot.slane %v394, %v405
        %v409 = vsub.f32 %v348, %v402
        %v410 = vsub.f32 %v349, %v406
        %v413 = vcombine.low %v409, %v410
        %v415 = vunpack.c.l.s4 1966171168
        %v416 = vunpack.c.0.s8 %v415
        %v417 = vlaneseq
        %v418 = vshrl.u32 %v417, 7
        %v419 = vsub.s32 %v416, %v418
        %v420 = vrot.slane %v413, %v419
        %v422 = vunpack.c.l.s4 1966171168
        %v423 = vunpack.c.0.s8 %v422
        %v424 = vlaneseq
        %v425 = vshrl.u32 %v424, 7
        %v426 = vsub.s32 %v423, %v425
        %v427 = vrot.slane %v420, %v426
        %v429 = vmul.f32 %v397, %v427
        %v430 = vlaneseq
        %vm431 = vcmp.ge.s32.totalorder %v430, 0
        %vm432 = vcmp.lt.s32.totalorder %v430, 256
        %vm433 = vmand %vm431, %vm432
        %434 = vst.msk [vmem:[%s251] sm:$0x3] %vm433, %v429
        %v436 = vlaneseq
        %v437 = vshrl.u32 %v436, 7
        %v438 = vsub.s32 0, %v437
        %v439 = vrot.slane %v429, %v438
        %v440 = vlaneseq
        %v441 = vshrl.u32 %v440, 7
        %v442 = vsub.s32 1, %v441
        %v443 = vrot.slane %v429, %v442
        %vm446 = vcmask 1040384
        %v447 = vsel %vm446, %v439, 0.0
        %v448 = vsel %vm446, %v443, 0.0
        %v449 = vadd.f32 %v447, %v448
        %450 = vadd.xlane.f32.xlu0 %v449
        %v451 = vpop.xlane.xlu0 %450
        %v452 = vrot.slane %v451, 4
        %v453 = vadd.f32 %v451, %v452
        %v454 = vrot.slane %v453, 2
        %v455 = vadd.f32 %v453, %v454
        %v456 = vrot.slane %v455, 1
        %v457 = vadd.f32 %v455, %v456
        %s458 = vtos %v457
        %v459 = vstv %s458
        %460 = vst [vmem:[%s293] sm:$0x1] %v459
        %v462 = vlaneseq
        %v463 = vshrl.u32 %v462, 7
        %v464 = vsub.s32 0, %v463
        %v465 = vrot.slane %v397, %v464
        %v466 = vlaneseq
        %v467 = vshrl.u32 %v466, 7
        %v468 = vsub.s32 1, %v467
        %v469 = vrot.slane %v397, %v468
        %v472 = vsel %vm446, %v465, 0.0
        %v473 = vsel %vm446, %v469, 0.0
        %v474 = vadd.f32 %v472, %v473
        %475 = vadd.xlane.f32.xlu0 %v474
        %v476 = vpop.xlane.xlu0 %475
        %v477 = vrot.slane %v476, 4
        %v478 = vadd.f32 %v476, %v477
        %v479 = vrot.slane %v478, 2
        %v480 = vadd.f32 %v478, %v479
        %v481 = vrot.slane %v480, 1
        %v482 = vadd.f32 %v480, %v481
        %s483 = vtos %v482
        %v484 = vstv %s483
        %485 = vst [vmem:[%s299] sm:$0x1] %v484
        %s486 = sand.u32 %s104, 1
        %s487 = scalar_lea.sflag [#allocation5], %s486
        %s488 = sand.u32 %s104, 1
        %s489 = smul.addr %s488, 2
        %s490 = scalar_lea.vmem [#allocation4], %s489
        %p491 = scmp.lt.s32.totalorder %s30, 1
        %s492 = scalar_select %p491, %s30, 1
        %p493 = scmp.lt.s32.totalorder %s31, 0
        %s494 = scalar_select %p493, %s31, 0
        %s495 = sadd.s32 %s494, %s492
        %s496 = scalar_lea.vmem %s4, %s495
        %p497 = scmp.lt.s32.totalorder %s30, 1
        %s498 = scalar_select %p497, %s30, 1
        %p499 = scmp.lt.s32.totalorder %s31, 0
        %s500 = scalar_select %p499, %s31, 0
        %s501 = sadd.s32 %s500, %s498
        %s502 = scalar_lea.vmem %s5, %s501
        // Predicated region
        $region29: #{weighted_ce_loss.1} parent=27 // pred_check
          %p503 = pneg %p114
        $region30: #{weighted_ce_loss.1} parent=27 // pred_check_branch
          %505 = sbr.rel (%p503) target = $region32
        $region31: #{weighted_ce_loss.1} parent=27 // pred_region
          %s506 = smul.u32 2, %s31
          %s508 = ssub.s32 32, 32
          %509 = vsyncadd %s487, %s508
          %s510 = smul.addr %s30, 2
          %s511 = sadd.s32 %s506, %s510
          %s512 = smul.addr %s511, 16
          %s513 = scalar_lea.hbm %s3, %s512
          %s515 = sshll.u32 %s490, 4
          %s516 = int_to_ptr.vmem [resolvable:$true] %s515
          %518 = dma.vmem_to_hbm [thread:$0]  %s516, 32, %s513, %s487
        $region32: #{weighted_ce_loss.1} parent=27 // pred_fallthru
          _
        // Predicated region
        $region33: #{weighted_ce_loss.1} parent=27 // pred_check
          %p519 = pneg %p142
        $region34: #{weighted_ce_loss.1} parent=27 // pred_check_branch
          %521 = sbr.rel (%p519) target = $region36
        $region35: #{weighted_ce_loss.1} parent=27 // pred_region
          _
        $region36: #{weighted_ce_loss.1} parent=27 // pred_fallthru
          _
        // Predicated region
        $region37: #{weighted_ce_loss.1} parent=27 // pred_check
          %p522 = pneg %p170
        $region38: #{weighted_ce_loss.1} parent=27 // pred_check_branch
          %524 = sbr.rel (%p522) target = $region40
        $region39: #{weighted_ce_loss.1} parent=27 // pred_region
          _
        $region40: #{weighted_ce_loss.1} parent=27 // pred_fallthru
          _
      $region28: #{weighted_ce_loss.1} parent=5 // pred_fallthru
        _
      %p525 = scmp.le.s32.totalorder 2, %s21
      // Predicated region
      $region41: #{weighted_ce_loss.1} parent=5 // pred_check
        %p526 = pneg %p525
      $region42: #{weighted_ce_loss.1} parent=5 // pred_check_branch
        %528 = sbr.rel (%p526) target = $region44
      $region43: #{weighted_ce_loss.1} parent=5 // pred_region
        %s529 = ssub.s32 %s21, 2
        // Predicated region
        $region45: #{weighted_ce_loss.1} parent=43 // pred_check
          %p530 = pneg %p120
        $region46: #{weighted_ce_loss.1} parent=43 // pred_check_branch
          %532 = sbr.rel (%p530) target = $region48
        $region47: #{weighted_ce_loss.1} parent=43 // pred_region
          %s533 = sand.u32 %s105, 1
          %s534 = scalar_lea.sflag [#allocation5], %s533
          %s535 = sand.u32 %s105, 1
          %s536 = smul.addr %s535, 2
          %s537 = scalar_lea.vmem [#allocation4], %s536
          %538 = dma.done %s534, 32
        $region48: #{weighted_ce_loss.1} parent=43 // pred_fallthru
          _
        // Predicated region
        $region49: #{weighted_ce_loss.1} parent=43 // pred_check
          %p539 = pneg %p148
        $region50: #{weighted_ce_loss.1} parent=43 // pred_check_branch
          %541 = sbr.rel (%p539) target = $region52
        $region51: #{weighted_ce_loss.1} parent=43 // pred_region
          %p542 = scmp.lt.s32.totalorder %s32, 1
          %s543 = scalar_select %p542, %s32, 1
          %p544 = scmp.lt.s32.totalorder %s33, 0
          %s545 = scalar_select %p544, %s33, 0
          %s546 = sadd.s32 %s545, %s543
          %s547 = scalar_lea.vmem %s4, %s546
        $region52: #{weighted_ce_loss.1} parent=43 // pred_fallthru
          _
        // Predicated region
        $region53: #{weighted_ce_loss.1} parent=43 // pred_check
          %p548 = pneg %p176
        $region54: #{weighted_ce_loss.1} parent=43 // pred_check_branch
          %550 = sbr.rel (%p548) target = $region56
        $region55: #{weighted_ce_loss.1} parent=43 // pred_region
          %p551 = scmp.lt.s32.totalorder %s32, 1
          %s552 = scalar_select %p551, %s32, 1
          %p553 = scmp.lt.s32.totalorder %s33, 0
          %s554 = scalar_select %p553, %s33, 0
          %s555 = sadd.s32 %s554, %s552
          %s556 = scalar_lea.vmem %s5, %s555
        $region56: #{weighted_ce_loss.1} parent=43 // pred_fallthru
          _
      $region44: #{weighted_ce_loss.1} parent=5 // pred_fallthru
        _
    $region6: #{weighted_ce_loss.1} parent=1 // loop_footer
      %s25 = sadd.s32 1, %s21
    $region7: #{weighted_ce_loss.1} parent=1 // loop_footer_branch
      %20 = sbr.rel target = $region3
    $region8: #{weighted_ce_loss.1} parent=1 // loop_exit
      _
    %557 = vsyncpa [#allocation5], 1
    %s558 = scalar_lea.sflag [#allocation5], 1
    %559 = vsyncpa %s558, 1

</llo_original>
